<compile_context>
chip_gen: v5e
topology: v5e:2x2
jax: 0.10.0
libtpu: 0.0.40
codegen_flags: <defaults>
</compile_context>

<pallas_src>
import jax
import jax.numpy as jnp
from jax.experimental import pallas as pl
from jax.experimental.pallas import tpu as pltpu


def _round_up(x, m):
    return ((x + m - 1) // m) * m


def critic_kernel(s_ref, a_ref,
                  w1s_ref, w1a_ref, b1_ref,
                  w2_ref, b2_ref,
                  w3_ref, b3_ref,
                  w4_ref, b4_ref,
                  o_ref):
    """Whole 4-layer MLP for one batch tile; weights resident in VMEM.

    Layer 1 fuses the state/action concat via a split W1. All matmuls
    accumulate in f32; matmul inputs use the weights' dtype (f32 or bf16).
    """
    cdt = w2_ref.dtype                       # compute dtype for MXU inputs

    s = s_ref[...].astype(cdt)               # (TB, n_states)  (no-op when streamed in cdt)
    a = a_ref[...].astype(cdt)               # (TB, action_dim)

    # Layer 1: cat([s, a]) @ W1  ==  s @ W1[:n_states] + a @ W1[n_states:]
    h = (jnp.dot(s, w1s_ref[...], preferred_element_type=jnp.float32)
         + jnp.dot(a, w1a_ref[...], preferred_element_type=jnp.float32)
         + b1_ref[...])
    h = jnp.maximum(h, 0.0)

    h = jnp.dot(h.astype(cdt), w2_ref[...],
                preferred_element_type=jnp.float32) + b2_ref[...]
    h = jnp.maximum(h, 0.0)

    h = jnp.dot(h.astype(cdt), w3_ref[...],
                preferred_element_type=jnp.float32) + b3_ref[...]
    h = jnp.maximum(h, 0.0)

    o = jnp.dot(h.astype(cdt), w4_ref[...],
                preferred_element_type=jnp.float32) + b4_ref[...]
    o_ref[...] = o.astype(o_ref.dtype)       # (TB, action_dim)


def prepare_critic_params(params, n_states, compute_dtype=jnp.float32):
    """One-time weight prep, hoisted out of the per-call path.

    params = ((w1, b1), (w2, b2), (w3, b3), (w4, b4)) with wk: (in, out)
    (i.e. PyTorch W.T) and bk: (1, out). Returns the flat operand tuple the
    kernel expects: W1 split into state/action halves, weights cast to the
    compute dtype, biases kept f32.
    """
    (w1, b1), (w2, b2), (w3, b3), (w4, b4) = params
    cdt = compute_dtype
    return (w1[:n_states, :].astype(cdt),    # W1 state half
            w1[n_states:, :].astype(cdt),    # W1 action half (fused concat)
            b1.astype(jnp.float32),
            w2.astype(cdt), b2.astype(jnp.float32),
            w3.astype(cdt), b3.astype(jnp.float32),
            w4.astype(cdt), b4.astype(jnp.float32))


def critic_forward(state, action, prepared, *, tile_b=2048):
    """Run the DDPG critic forward pass in a single Pallas call.

    prepared = prepare_critic_params(params, n_states, compute_dtype).
    The streaming / matmul-input dtype is inferred from the prepared weights.
    """
    (w1s, w1a, b1, w2, b2, w3, b3, w4, b4) = prepared

    B, n_states = state.shape
    action_dim_in = action.shape[1]
    hid = w2.shape[0]
    out_dim = w4.shape[1]

    cdt = w2.dtype                           # streaming + MXU-input dtype
    itemsize = jnp.dtype(cdt).itemsize
    sub = 8 * (4 // itemsize)                # sublane rows: 8 for f32, 16 for bf16

    # Stream activations in the compute dtype (halves DMA bytes for bf16).
    s = state.astype(cdt)
    a = action.astype(cdt)

    # --- batch tiling: big tiles; >=2 balanced steps for large B (v7x 2 TCs) --
    SPLIT_THRESHOLD = 512                    # below this, 1 tile is cheapest
    TB = max(sub, (int(tile_b) // sub) * sub)
    if B >= SPLIT_THRESHOLD:
        TB = min(TB, _round_up(pl.cdiv(B, 2), sub))
    if TB >= B:
        TB = B                               # single block == full batch (always legal)
    grid_n = pl.cdiv(B, TB)                  # ragged last block masked by Pallas

    def tiled(last):
        return pl.BlockSpec((TB, last), lambda i: (i, 0))

    def resident(arr):
        # Constant index_map -> block is fetched once and stays VMEM-resident.
        return pl.BlockSpec(arr.shape, lambda i: (0, 0))

    operands = (s, a, w1s, w1a, b1, w2, b2, w3, b3, w4, b4)
    in_specs = [
        tiled(n_states), tiled(action_dim_in),
        resident(w1s), resident(w1a), resident(b1),
        resident(w2), resident(b2),
        resident(w3), resident(b3),
        resident(w4), resident(b4),
    ]

    flops = 2 * B * (n_states * hid + action_dim_in * hid
                     + 2 * hid * hid + hid * out_dim)
    bytes_accessed = int(sum(int(o.size) * o.dtype.itemsize for o in operands)
                         + B * out_dim * 4)
    cost = pl.CostEstimate(flops=int(flops), transcendentals=0,
                           bytes_accessed=bytes_accessed)

    # Raise the scoped-VMEM limit only when a very large tile needs it
    # (v7x: 64 MiB physical, 32 MiB default scoped limit).
    lane = 128                               # minor-dim layout padding in VMEM
    per_row = 2 * lane * itemsize + lane * 4             # s + a + out rows
    per_tile = 2 * TB * per_row                           # double-buffered streams
    cp_kwargs = dict(dimension_semantics=("parallel",))
    if per_tile > 24 * 1024 * 1024:
        cp_kwargs["vmem_limit_bytes"] = int(min(64 * 1024 * 1024,
                                                per_tile + (8 << 20)))

    out = pl.pallas_call(
        critic_kernel,
        out_shape=jax.ShapeDtypeStruct((B, out_dim), jnp.float32),
        grid=(grid_n,),
        in_specs=in_specs,
        out_specs=pl.BlockSpec((TB, out_dim), lambda i: (i, 0)),
        compiler_params=pltpu.CompilerParams(**cp_kwargs),
        cost_estimate=cost,
    )(*operands)

    return out


def init_linear(key, in_dim, out_dim):
    """Deterministic init mimicking nn.Linear default (uniform +/- 1/sqrt(in))."""
    k_w, k_b = jax.random.split(key)
    bound = 1.0 / jnp.sqrt(jnp.float32(in_dim))
    # Stored already transposed: (in_dim, out_dim)  ==  W.T in PyTorch terms.
    w = jax.random.uniform(k_w, (in_dim, out_dim), jnp.float32, -bound, bound)
    b = jax.random.uniform(k_b, (1, out_dim), jnp.float32, -bound, bound)
    return w, b


if __name__ == "__main__":
    # Small shapes consistent with the module's forward.
    batch = 8
    n_states = 24
    action_dim = 8
    hidden = 64  # int(hidden2) in the reference

    key = jax.random.PRNGKey(0)
    k_s, k_a, k1, k2, k3, k4 = jax.random.split(key, 6)

    state = jax.random.normal(k_s, (batch, n_states), jnp.float32)
    action = jax.random.normal(k_a, (batch, action_dim), jnp.float32)

    params = (
        init_linear(k1, n_states + action_dim, hidden),
        init_linear(k2, hidden, hidden),
        init_linear(k3, hidden, hidden),
        init_linear(k4, hidden, action_dim),
    )

    # Pure-JAX reference of the same math.
    x = jnp.concatenate([state, action], axis=1)
    h = jnp.maximum(x @ params[0][0] + params[0][1], 0.0)
    h = jnp.maximum(h @ params[1][0] + params[1][1], 0.0)
    h = jnp.maximum(h @ params[2][0] + params[2][1], 0.0)
    q_ref = h @ params[3][0] + params[3][1]

    fwd = jax.jit(critic_forward)

    # f32 path (exact check).
    prep_f32 = prepare_critic_params(params, n_states, jnp.float32)
    q = jax.block_until_ready(fwd(state, action, prep_f32))
    assert q.shape == (batch, action_dim)
    assert jnp.allclose(q, q_ref, atol=1e-4, rtol=1e-4)

    # bf16 weights + bf16-streamed activations, f32 accumulation (loose tol by design).
    prep_bf16 = prepare_critic_params(params, n_states, jnp.bfloat16)
    q_bf16 = jax.block_until_ready(fwd(state, action, prep_bf16))
    assert q_bf16.shape == (batch, action_dim)
    assert jnp.allclose(q_bf16, q_ref, atol=5e-2, rtol=5e-2)

    print("KERNEL_OK")
</pallas_src>

<mosaic_0001>
module attributes {stable_mosaic.version = 11 : i64} {
  func.func @critic_kernel(%arg0: i32, %arg1: memref<8x24xf32, #tpu.memory_space<vmem>>, %arg2: memref<8x8xf32, #tpu.memory_space<vmem>>, %arg3: memref<24x64xf32, #tpu.memory_space<vmem>>, %arg4: memref<8x64xf32, #tpu.memory_space<vmem>>, %arg5: memref<1x64xf32, #tpu.memory_space<vmem>>, %arg6: memref<64x64xf32, #tpu.memory_space<vmem>>, %arg7: memref<1x64xf32, #tpu.memory_space<vmem>>, %arg8: memref<64x64xf32, #tpu.memory_space<vmem>>, %arg9: memref<1x64xf32, #tpu.memory_space<vmem>>, %arg10: memref<64x8xf32, #tpu.memory_space<vmem>>, %arg11: memref<1x8xf32, #tpu.memory_space<vmem>>, %arg12: memref<8x8xf32, #tpu.memory_space<vmem>>) attributes {dimension_semantics = [#tpu.dimension_semantics<parallel>], iteration_bounds = array<i64: 1>, scalar_prefetch = 0 : i64, scratch_operands = 0 : i64, tpu.core_type = #tpu.core_type<tc>, window_params = [{transform_indices = @transform_0, window_bounds = array<i64: 8, 24>}, {transform_indices = @transform_1, window_bounds = array<i64: 8, 8>}, {pipeline_mode = #tpu.pipeline_mode<synchronous>, transform_indices = @transform_2, window_bounds = array<i64: 24, 64>}, {pipeline_mode = #tpu.pipeline_mode<synchronous>, transform_indices = @transform_3, window_bounds = array<i64: 8, 64>}, {pipeline_mode = #tpu.pipeline_mode<synchronous>, transform_indices = @transform_4, window_bounds = array<i64: 1, 64>}, {pipeline_mode = #tpu.pipeline_mode<synchronous>, transform_indices = @transform_5, window_bounds = array<i64: 64, 64>}, {pipeline_mode = #tpu.pipeline_mode<synchronous>, transform_indices = @transform_6, window_bounds = array<i64: 1, 64>}, {pipeline_mode = #tpu.pipeline_mode<synchronous>, transform_indices = @transform_7, window_bounds = array<i64: 64, 64>}, {pipeline_mode = #tpu.pipeline_mode<synchronous>, transform_indices = @transform_8, window_bounds = array<i64: 1, 64>}, {pipeline_mode = #tpu.pipeline_mode<synchronous>, transform_indices = @transform_9, window_bounds = array<i64: 64, 8>}, {pipeline_mode = #tpu.pipeline_mode<synchronous>, transform_indices = @transform_10, window_bounds = array<i64: 1, 8>}, {transform_indices = @transform_11, window_bounds = array<i64: 8, 8>}]} {
    %c0 = arith.constant 0 : index
    %c0_0 = arith.constant 0 : index
    %0 = vector.load %arg1[%c0, %c0_0] : memref<8x24xf32, #tpu.memory_space<vmem>>, vector<8x24xf32>
    %c0_1 = arith.constant 0 : index
    %c0_2 = arith.constant 0 : index
    %1 = vector.load %arg2[%c0_1, %c0_2] : memref<8x8xf32, #tpu.memory_space<vmem>>, vector<8x8xf32>
    %c0_3 = arith.constant 0 : index
    %c0_4 = arith.constant 0 : index
    %2 = vector.load %arg3[%c0_3, %c0_4] : memref<24x64xf32, #tpu.memory_space<vmem>>, vector<24x64xf32>
    %cst = arith.constant dense<0.000000e+00> : vector<8x64xf32>
    %3 = tpu.matmul %0, %2, %cst {dimension_numbers = #tpu.dot_dimension_numbers<[1], [0], [0], [1], [0, 0, 1, 1], [], []>} : vector<8x24xf32>, vector<24x64xf32>, vector<8x64xf32> -> vector<8x64xf32>
    %c0_5 = arith.constant 0 : index
    %c0_6 = arith.constant 0 : index
    %4 = vector.load %arg4[%c0_5, %c0_6] : memref<8x64xf32, #tpu.memory_space<vmem>>, vector<8x64xf32>
    %cst_7 = arith.constant dense<0.000000e+00> : vector<8x64xf32>
    %5 = tpu.matmul %1, %4, %cst_7 {dimension_numbers = #tpu.dot_dimension_numbers<[1], [0], [0], [1], [0, 0, 1, 1], [], []>} : vector<8x8xf32>, vector<8x64xf32>, vector<8x64xf32> -> vector<8x64xf32>
    %6 = arith.addf %3, %5 : vector<8x64xf32>
    %c0_8 = arith.constant 0 : index
    %c0_9 = arith.constant 0 : index
    %7 = vector.load %arg5[%c0_8, %c0_9] : memref<1x64xf32, #tpu.memory_space<vmem>>, vector<1x64xf32>
    %8 = vector.broadcast %7 : vector<1x64xf32> to vector<8x64xf32>
    %9 = arith.addf %6, %8 : vector<8x64xf32>
    %cst_10 = arith.constant 0.000000e+00 : f32
    %10 = vector.broadcast %cst_10 : f32 to vector<8x64xf32>
    %11 = arith.maximumf %9, %10 : vector<8x64xf32>
    %c0_11 = arith.constant 0 : index
    %c0_12 = arith.constant 0 : index
    %12 = vector.load %arg6[%c0_11, %c0_12] : memref<64x64xf32, #tpu.memory_space<vmem>>, vector<64x64xf32>
    %cst_13 = arith.constant dense<0.000000e+00> : vector<8x64xf32>
    %13 = tpu.matmul %11, %12, %cst_13 {dimension_numbers = #tpu.dot_dimension_numbers<[1], [0], [0], [1], [0, 0, 1, 1], [], []>} : vector<8x64xf32>, vector<64x64xf32>, vector<8x64xf32> -> vector<8x64xf32>
    %c0_14 = arith.constant 0 : index
    %c0_15 = arith.constant 0 : index
    %14 = vector.load %arg7[%c0_14, %c0_15] : memref<1x64xf32, #tpu.memory_space<vmem>>, vector<1x64xf32>
    %15 = vector.broadcast %14 : vector<1x64xf32> to vector<8x64xf32>
    %16 = arith.addf %13, %15 : vector<8x64xf32>
    %cst_16 = arith.constant 0.000000e+00 : f32
    %17 = vector.broadcast %cst_16 : f32 to vector<8x64xf32>
    %18 = arith.maximumf %16, %17 : vector<8x64xf32>
    %c0_17 = arith.constant 0 : index
    %c0_18 = arith.constant 0 : index
    %19 = vector.load %arg8[%c0_17, %c0_18] : memref<64x64xf32, #tpu.memory_space<vmem>>, vector<64x64xf32>
    %cst_19 = arith.constant dense<0.000000e+00> : vector<8x64xf32>
    %20 = tpu.matmul %18, %19, %cst_19 {dimension_numbers = #tpu.dot_dimension_numbers<[1], [0], [0], [1], [0, 0, 1, 1], [], []>} : vector<8x64xf32>, vector<64x64xf32>, vector<8x64xf32> -> vector<8x64xf32>
    %c0_20 = arith.constant 0 : index
    %c0_21 = arith.constant 0 : index
    %21 = vector.load %arg9[%c0_20, %c0_21] : memref<1x64xf32, #tpu.memory_space<vmem>>, vector<1x64xf32>
    %22 = vector.broadcast %21 : vector<1x64xf32> to vector<8x64xf32>
    %23 = arith.addf %20, %22 : vector<8x64xf32>
    %cst_22 = arith.constant 0.000000e+00 : f32
    %24 = vector.broadcast %cst_22 : f32 to vector<8x64xf32>
    %25 = arith.maximumf %23, %24 : vector<8x64xf32>
    %c0_23 = arith.constant 0 : index
    %c0_24 = arith.constant 0 : index
    %26 = vector.load %arg10[%c0_23, %c0_24] : memref<64x8xf32, #tpu.memory_space<vmem>>, vector<64x8xf32>
    %cst_25 = arith.constant dense<0.000000e+00> : vector<8x8xf32>
    %27 = tpu.matmul %25, %26, %cst_25 {dimension_numbers = #tpu.dot_dimension_numbers<[1], [0], [0], [1], [0, 0, 1, 1], [], []>} : vector<8x64xf32>, vector<64x8xf32>, vector<8x8xf32> -> vector<8x8xf32>
    %c0_26 = arith.constant 0 : index
    %c0_27 = arith.constant 0 : index
    %28 = vector.load %arg11[%c0_26, %c0_27] : memref<1x8xf32, #tpu.memory_space<vmem>>, vector<1x8xf32>
    %29 = vector.broadcast %28 : vector<1x8xf32> to vector<8x8xf32>
    %30 = arith.addf %27, %29 : vector<8x8xf32>
    %c0_28 = arith.constant 0 : index
    %c0_29 = arith.constant 0 : index
    %31 = vector.load %arg12[%c0_28, %c0_29] : memref<8x8xf32, #tpu.memory_space<vmem>>, vector<8x8xf32>
    tpu.vector_store %arg12[%c0_28, %c0_29], %30 {strides = array<i32>} : memref<8x8xf32, #tpu.memory_space<vmem>>, vector<8x8xf32>,
    return
  }
  func.func @transform_0(%arg0: i32) -> (i32, i32) {
    %c0_i32 = arith.constant 0 : i32
    %c0_i32_0 = arith.constant 0 : i32
    return %arg0, %c0_i32 : i32, i32
  }
  func.func @transform_1(%arg0: i32) -> (i32, i32) {
    %c0_i32 = arith.constant 0 : i32
    %c0_i32_0 = arith.constant 0 : i32
    return %arg0, %c0_i32 : i32, i32
  }
  func.func @transform_2(%arg0: i32) -> (i32, i32) {
    %c0_i32 = arith.constant 0 : i32
    %c0_i32_0 = arith.constant 0 : i32
    %c0_i32_1 = arith.constant 0 : i32
    return %c0_i32, %c0_i32_0 : i32, i32
  }
  func.func @transform_3(%arg0: i32) -> (i32, i32) {
    %c0_i32 = arith.constant 0 : i32
    %c0_i32_0 = arith.constant 0 : i32
    %c0_i32_1 = arith.constant 0 : i32
    return %c0_i32, %c0_i32_0 : i32, i32
  }
  func.func @transform_4(%arg0: i32) -> (i32, i32) {
    %c0_i32 = arith.constant 0 : i32
    %c0_i32_0 = arith.constant 0 : i32
    %c0_i32_1 = arith.constant 0 : i32
    return %c0_i32, %c0_i32_0 : i32, i32
  }
  func.func @transform_5(%arg0: i32) -> (i32, i32) {
    %c0_i32 = arith.constant 0 : i32
    %c0_i32_0 = arith.constant 0 : i32
    %c0_i32_1 = arith.constant 0 : i32
    return %c0_i32, %c0_i32_0 : i32, i32
  }
  func.func @transform_6(%arg0: i32) -> (i32, i32) {
    %c0_i32 = arith.constant 0 : i32
    %c0_i32_0 = arith.constant 0 : i32
    %c0_i32_1 = arith.constant 0 : i32
    return %c0_i32, %c0_i32_0 : i32, i32
  }
  func.func @transform_7(%arg0: i32) -> (i32, i32) {
    %c0_i32 = arith.constant 0 : i32
    %c0_i32_0 = arith.constant 0 : i32
    %c0_i32_1 = arith.constant 0 : i32
    return %c0_i32, %c0_i32_0 : i32, i32
  }
  func.func @transform_8(%arg0: i32) -> (i32, i32) {
    %c0_i32 = arith.constant 0 : i32
    %c0_i32_0 = arith.constant 0 : i32
    %c0_i32_1 = arith.constant 0 : i32
    return %c0_i32, %c0_i32_0 : i32, i32
  }
  func.func @transform_9(%arg0: i32) -> (i32, i32) {
    %c0_i32 = arith.constant 0 : i32
    %c0_i32_0 = arith.constant 0 : i32
    %c0_i32_1 = arith.constant 0 : i32
    return %c0_i32, %c0_i32_0 : i32, i32
  }
  func.func @transform_10(%arg0: i32) -> (i32, i32) {
    %c0_i32 = arith.constant 0 : i32
    %c0_i32_0 = arith.constant 0 : i32
    %c0_i32_1 = arith.constant 0 : i32
    return %c0_i32, %c0_i32_0 : i32, i32
  }
  func.func @transform_11(%arg0: i32) -> (i32, i32) {
    %c0_i32 = arith.constant 0 : i32
    %c0_i32_0 = arith.constant 0 : i32
    return %arg0, %c0_i32 : i32, i32
  }
}

</mosaic_0001>

<llo_original>
// kernel: critic_forward.1
$region0: #{critic_forward.1}
  #allocation0 [shape = 'u32[]', space=smem, size = 0x4, offset = 0x4, fixed_abs, tag = 'smem constant byte address 0x4 - core index']
  #allocation1 [shape = 'u32[72,128]{1,0:T(1,128)}', space=vmem, size = 0x9000, scoped, tag = 'internal scratch']
  %s0 = inlined_call_operand.vmem [shape: f32[8,24], index: 0, kind: input, shape index: {}]
  %s1 = inlined_call_operand.hbm [shape: f32[8,8], index: 1, kind: input, shape index: {}]
  %s2 = inlined_call_operand.hbm [shape: f32[24,64], index: 2, kind: input, shape index: {}]
  %s3 = inlined_call_operand.hbm [shape: f32[8,64], index: 3, kind: input, shape index: {}]
  %s4 = inlined_call_operand.hbm [shape: f32[1,64], index: 4, kind: input, shape index: {}]
  %s5 = inlined_call_operand.vmem [shape: f32[64,64], index: 5, kind: input, shape index: {}]
  %s6 = inlined_call_operand.hbm [shape: f32[1,64], index: 6, kind: input, shape index: {}]
  %s7 = inlined_call_operand.hbm [shape: f32[64,64], index: 7, kind: input, shape index: {}]
  %s8 = inlined_call_operand.hbm [shape: f32[1,64], index: 8, kind: input, shape index: {}]
  %s9 = inlined_call_operand.vmem [shape: f32[64,8], index: 9, kind: input, shape index: {}]
  %s10 = inlined_call_operand.vmem [shape: f32[1,8], index: 10, kind: input, shape index: {}]
  %s11 = inlined_call_operand.hbm [shape: f32[8,8], index: 11, kind: output, shape index: {}]
  %s12 = sld [smem:[#allocation0]]
  $region82: #{critic_forward.1} parent=0
    _
  %s14 = ssub.s32 1, %s12
  %s15 = scalar_select 0, %s14, %s12
  $region1: #{critic_forward.1} parent=0
    #allocation2 [shape = 'u8[4096]{0}', space=vmem, size = 0x1000, scoped, tag = 'input window, operand 1, single buffered']
    #allocation3 [shape = 's32[1]{0}', space=sflag, size = 0x4, scoped, tag = 'scoped memory for critic_forward.1']
    #allocation4 [shape = 's32[1]{0}', space=sflag, size = 0x4, scoped, tag = 'scoped memory for critic_forward.1']
    #allocation5 [shape = 'u8[12288]{0}', space=vmem, size = 0x3000, scoped, tag = 'input window, operand 2, single buffered']
    #allocation6 [shape = 's32[1]{0}', space=sflag, size = 0x4, scoped, tag = 'scoped memory for critic_forward.1']
    #allocation7 [shape = 'u8[4096]{0}', space=vmem, size = 0x1000, scoped, tag = 'input window, operand 3, single buffered']
    #allocation8 [shape = 'u8[512]{0}', space=vmem, size = 0x400, scoped, tag = 'input window, operand 4, single buffered']
    #allocation9 [shape = 's32[1]{0}', space=sflag, size = 0x4, scoped, tag = 'scoped memory for critic_forward.1']
    #allocation10 [shape = 'u8[512]{0}', space=vmem, size = 0x400, scoped, tag = 'input window, operand 6, single buffered']
    #allocation11 [shape = 'u8[32768]{0}', space=vmem, size = 0x8000, scoped, tag = 'input window, operand 7, single buffered']
    #allocation12 [shape = 's32[1]{0}', space=sflag, size = 0x4, scoped, tag = 'scoped memory for critic_forward.1']
    #allocation13 [shape = 'u8[512]{0}', space=vmem, size = 0x400, scoped, tag = 'input window, operand 8, single buffered']
    #allocation14 [shape = 'u8[4096]{0}', space=vmem, size = 0x1000, scoped, tag = 'output window, operand 0, single buffered']
    %16 = vsyncpa [#allocation3], 0
    %17 = vsyncpa [#allocation6], 0
    %18 = vsyncpa [#allocation9], 0
    %19 = vsyncpa [#allocation12], 0
    %20 = vsyncpa [#allocation4], 0
    // Predicated region
    $region2: #{critic_forward.1} parent=1 // pred_check
      _
    $region3: #{critic_forward.1} parent=1 // pred_check_branch
      %22 = sbr.rel (0) target = $region5
    $region4: #{critic_forward.1} parent=1 // pred_region
      _
    $region5: #{critic_forward.1} parent=1 // pred_fallthru
      _
    // Predicated region
    $region6: #{critic_forward.1} parent=1 // pred_check
      _
    $region7: #{critic_forward.1} parent=1 // pred_check_branch
      %24 = sbr.rel (0) target = $region9
    $region8: #{critic_forward.1} parent=1 // pred_region
      %26 = vsyncadd [#allocation3], 0
      %s28 = sshll.u32 %s1, 4
      %s29 = int_to_ptr.hbm [resolvable:$true] %s28
      %s30 = sshll.u32 [#allocation2], 4
      %s31 = int_to_ptr.vmem [resolvable:$true] %s30
      %33 = dma.hbm_to_vmem [thread:$0]  %s29, 128, %s31, [#allocation3]
    $region9: #{critic_forward.1} parent=1 // pred_fallthru
      _
    // Predicated region
    $region10: #{critic_forward.1} parent=1 // pred_check
      _
    $region11: #{critic_forward.1} parent=1 // pred_check_branch
      %35 = sbr.rel (0) target = $region13
    $region12: #{critic_forward.1} parent=1 // pred_region
      %37 = vsyncadd [#allocation6], 0
      %s38 = sshll.u32 %s2, 4
      %s39 = int_to_ptr.hbm [resolvable:$true] %s38
      %s40 = sshll.u32 [#allocation5], 4
      %s41 = int_to_ptr.vmem [resolvable:$true] %s40
      %46 = dma.hbm_to_vmem [thread:$0]  %s39, 384, %s41, [#allocation6], 128, 128, 8
    $region13: #{critic_forward.1} parent=1 // pred_fallthru
      _
    // Predicated region
    $region14: #{critic_forward.1} parent=1 // pred_check
      _
    $region15: #{critic_forward.1} parent=1 // pred_check_branch
      %48 = sbr.rel (0) target = $region17
    $region16: #{critic_forward.1} parent=1 // pred_region
      %50 = vsyncadd [#allocation6], 0
      %s52 = sshll.u32 %s3, 4
      %s53 = int_to_ptr.hbm [resolvable:$true] %s52
      %s54 = sshll.u32 [#allocation7], 4
      %s55 = int_to_ptr.vmem [resolvable:$true] %s54
      %57 = dma.hbm_to_vmem [thread:$0]  %s53, 128, %s55, [#allocation6]
    $region17: #{critic_forward.1} parent=1 // pred_fallthru
      _
    // Predicated region
    $region18: #{critic_forward.1} parent=1 // pred_check
      _
    $region19: #{critic_forward.1} parent=1 // pred_check_branch
      %59 = sbr.rel (0) target = $region21
    $region20: #{critic_forward.1} parent=1 // pred_region
      %61 = vsyncadd [#allocation9], 0
      %s63 = sshll.u32 %s4, 4
      %s64 = int_to_ptr.hbm [resolvable:$true] %s63
      %s65 = sshll.u32 [#allocation8], 4
      %s66 = int_to_ptr.vmem [resolvable:$true] %s65
      %68 = dma.hbm_to_vmem [thread:$0]  %s64, 16, %s66, [#allocation9]
    $region21: #{critic_forward.1} parent=1 // pred_fallthru
      _
    // Predicated region
    $region22: #{critic_forward.1} parent=1 // pred_check
      _
    $region23: #{critic_forward.1} parent=1 // pred_check_branch
      %70 = sbr.rel (0) target = $region25
    $region24: #{critic_forward.1} parent=1 // pred_region
      _
    $region25: #{critic_forward.1} parent=1 // pred_fallthru
      _
    // Predicated region
    $region26: #{critic_forward.1} parent=1 // pred_check
      _
    $region27: #{critic_forward.1} parent=1 // pred_check_branch
      %72 = sbr.rel (0) target = $region29
    $region28: #{critic_forward.1} parent=1 // pred_region
      %74 = vsyncadd [#allocation9], 0
      %s76 = sshll.u32 %s6, 4
      %s77 = int_to_ptr.hbm [resolvable:$true] %s76
      %s78 = sshll.u32 [#allocation10], 4
      %s79 = int_to_ptr.vmem [resolvable:$true] %s78
      %81 = dma.hbm_to_vmem [thread:$0]  %s77, 16, %s79, [#allocation9]
    $region29: #{critic_forward.1} parent=1 // pred_fallthru
      _
    // Predicated region
    $region30: #{critic_forward.1} parent=1 // pred_check
      _
    $region31: #{critic_forward.1} parent=1 // pred_check_branch
      %83 = sbr.rel (0) target = $region33
    $region32: #{critic_forward.1} parent=1 // pred_region
      %85 = vsyncadd [#allocation12], 0
      %s86 = sshll.u32 %s7, 4
      %s87 = int_to_ptr.hbm [resolvable:$true] %s86
      %s88 = sshll.u32 [#allocation11], 4
      %s89 = int_to_ptr.vmem [resolvable:$true] %s88
      %94 = dma.hbm_to_vmem [thread:$0]  %s87, 1024, %s89, [#allocation12], 128, 128, 8
    $region33: #{critic_forward.1} parent=1 // pred_fallthru
      _
    // Predicated region
    $region34: #{critic_forward.1} parent=1 // pred_check
      _
    $region35: #{critic_forward.1} parent=1 // pred_check_branch
      %96 = sbr.rel (0) target = $region37
    $region36: #{critic_forward.1} parent=1 // pred_region
      %98 = vsyncadd [#allocation12], 0
      %s100 = sshll.u32 %s8, 4
      %s101 = int_to_ptr.hbm [resolvable:$true] %s100
      %s102 = sshll.u32 [#allocation13], 4
      %s103 = int_to_ptr.vmem [resolvable:$true] %s102
      %105 = dma.hbm_to_vmem [thread:$0]  %s101, 16, %s103, [#allocation12]
    $region37: #{critic_forward.1} parent=1 // pred_fallthru
      _
    // Predicated region
    $region38: #{critic_forward.1} parent=1 // pred_check
      _
    $region39: #{critic_forward.1} parent=1 // pred_check_branch
      %107 = sbr.rel (0) target = $region41
    $region40: #{critic_forward.1} parent=1 // pred_region
      _
    $region41: #{critic_forward.1} parent=1 // pred_fallthru
      _
    // Predicated region
    $region42: #{critic_forward.1} parent=1 // pred_check
      _
    $region43: #{critic_forward.1} parent=1 // pred_check_branch
      %109 = sbr.rel (0) target = $region45
    $region44: #{critic_forward.1} parent=1 // pred_region
      _
    $region45: #{critic_forward.1} parent=1 // pred_fallthru
      _
    // Predicated region
    $region46: #{critic_forward.1} parent=1 // pred_check
      _
    $region47: #{critic_forward.1} parent=1 // pred_check_branch
      %111 = sbr.rel (0) target = $region49
    $region48: #{critic_forward.1} parent=1 // pred_region
      %113 = dma.done [#allocation3], 128
    $region49: #{critic_forward.1} parent=1 // pred_fallthru
      _
    // Predicated region
    $region50: #{critic_forward.1} parent=1 // pred_check
      _
    $region51: #{critic_forward.1} parent=1 // pred_check_branch
      %115 = sbr.rel (0) target = $region53
    $region52: #{critic_forward.1} parent=1 // pred_region
      %117 = dma.done [#allocation6], 384
    $region53: #{critic_forward.1} parent=1 // pred_fallthru
      _
    // Predicated region
    $region54: #{critic_forward.1} parent=1 // pred_check
      _
    $region55: #{critic_forward.1} parent=1 // pred_check_branch
      %119 = sbr.rel (0) target = $region57
    $region56: #{critic_forward.1} parent=1 // pred_region
      %121 = dma.done [#allocation6], 128
    $region57: #{critic_forward.1} parent=1 // pred_fallthru
      _
    // Predicated region
    $region58: #{critic_forward.1} parent=1 // pred_check
      _
    $region59: #{critic_forward.1} parent=1 // pred_check_branch
      %123 = sbr.rel (0) target = $region61
    $region60: #{critic_forward.1} parent=1 // pred_region
      %125 = dma.done [#allocation9], 16
    $region61: #{critic_forward.1} parent=1 // pred_fallthru
      _
    // Predicated region
    $region62: #{critic_forward.1} parent=1 // pred_check
      _
    $region63: #{critic_forward.1} parent=1 // pred_check_branch
      %127 = sbr.rel (0) target = $region65
    $region64: #{critic_forward.1} parent=1 // pred_region
      %129 = dma.done [#allocation9], 16
    $region65: #{critic_forward.1} parent=1 // pred_fallthru
      _
    // Predicated region
    $region66: #{critic_forward.1} parent=1 // pred_check
      _
    $region67: #{critic_forward.1} parent=1 // pred_check_branch
      %131 = sbr.rel (0) target = $region69
    $region68: #{critic_forward.1} parent=1 // pred_region
      %133 = dma.done [#allocation12], 1024
    $region69: #{critic_forward.1} parent=1 // pred_fallthru
      _
    // Predicated region
    $region70: #{critic_forward.1} parent=1 // pred_check
      _
    $region71: #{critic_forward.1} parent=1 // pred_check_branch
      %135 = sbr.rel (0) target = $region73
    $region72: #{critic_forward.1} parent=1 // pred_region
      %137 = dma.done [#allocation12], 16
    $region73: #{critic_forward.1} parent=1 // pred_fallthru
      _
    %v138 = vld [vmem:[%s0] sm:$0xff]
    %v139 = vld [vmem:[#allocation2] sm:$0xff]
    %v140 = vld [vmem:[#allocation5] sm:$0xff]
    %v141 = vld [vmem:[#allocation5 + $0x8] sm:$0xff]
    %v142 = vld [vmem:[#allocation5 + $0x10] sm:$0xff]
    %v143 = vld [vmem:[#allocation7] sm:$0xff]
    %vm144 = vcmask 64512
    %v146 = vsel %vm144, %v139, 0
    %148 = vmatpush.msra.mxu0 0.0
    %149 = vmatpush.msra.mxu0 0.0
    %150 = vmatpush.msra.mxu0 0.0
    %151 = vmatpush.msra.mxu0 0.0
    %152 = vmatpush.msra.mxu0 0.0
    %153 = vmatpush.msra.mxu0 0.0
    %154 = vmatpush.msra.mxu0 0.0
    %155 = vmatpush.msra.mxu0 0.0
    %156 = vmatpush.msra.mxu0 0.0
    %157 = vmatpush.msra.mxu0 0.0
    %158 = vmatpush.msra.mxu0 0.0
    %159 = vmatpush.msra.mxu0 0.0
    %160 = vmatpush.msra.mxu0 0.0
    %161 = vmatpush.msra.mxu0 0.0
    %162 = vmatpush.msra.mxu0 0.0
    %163 = vmatpush.msra.mxu0 %v143
    %164 = vmatmul.f32.gmra.mxu0 %v146
    %v165 = vpop.f32.mrf.mxu0
    %v166 = vadd.f32 0.0, %v165
    %167 = vdwg.mxu0
    %vm168 = vcmask 195584
    %v170 = vsel %vm168, %v138, 0
    %172 = vmatpush.msra.mxu0 0.0
    %173 = vmatpush.msra.mxu0 0.0
    %174 = vmatpush.msra.mxu0 0.0
    %175 = vmatpush.msra.mxu0 0.0
    %176 = vmatpush.msra.mxu0 0.0
    %177 = vmatpush.msra.mxu0 0.0
    %178 = vmatpush.msra.mxu0 0.0
    %179 = vmatpush.msra.mxu0 0.0
    %180 = vmatpush.msra.mxu0 0.0
    %181 = vmatpush.msra.mxu0 0.0
    %182 = vmatpush.msra.mxu0 0.0
    %183 = vmatpush.msra.mxu0 0.0
    %184 = vmatpush.msra.mxu0 0.0
    %185 = vmatpush.msra.mxu0 %v142
    %186 = vmatpush.msra.mxu0 %v141
    %187 = vmatpush.msra.mxu0 %v140
    %188 = vmatmul.f32.gmra.mxu0 %v170
    %v189 = vpop.f32.mrf.mxu0
    %v190 = vadd.f32 %v166, %v189
    %191 = vdwg.mxu0
    %v192 = vld [vmem:[#allocation8] sm:$0x1]
    %v194 = vperm.slane %v192, 0
    %v196 = vadd.f32 %v190, %v194
    %v197 = vmax.f32 %v196, 0.0
    %v198 = vld [vmem:[%s5] sm:$0xff]
    %v199 = vld [vmem:[%s5 + $0x8] sm:$0xff]
    %v200 = vld [vmem:[%s5 + $0x10] sm:$0xff]
    %v201 = vld [vmem:[%s5 + $0x18] sm:$0xff]
    %v202 = vld [vmem:[%s5 + $0x20] sm:$0xff]
    %v203 = vld [vmem:[%s5 + $0x28] sm:$0xff]
    %v204 = vld [vmem:[%s5 + $0x30] sm:$0xff]
    %v205 = vld [vmem:[%s5 + $0x38] sm:$0xff]
    %v206 = vld [vmem:[#allocation10] sm:$0x1]
    %v208 = vperm.slane %v206, 0
    %vm210 = vcmask 523264
    %v212 = vsel %vm210, %v197, 0
    %214 = vmatpush.msra.mxu0 0.0
    %215 = vmatpush.msra.mxu0 0.0
    %216 = vmatpush.msra.mxu0 0.0
    %217 = vmatpush.msra.mxu0 0.0
    %218 = vmatpush.msra.mxu0 0.0
    %219 = vmatpush.msra.mxu0 0.0
    %220 = vmatpush.msra.mxu0 0.0
    %221 = vmatpush.msra.mxu0 0.0
    %222 = vmatpush.msra.mxu0 %v205
    %223 = vmatpush.msra.mxu0 %v204
    %224 = vmatpush.msra.mxu0 %v203
    %225 = vmatpush.msra.mxu0 %v202
    %226 = vmatpush.msra.mxu0 %v201
    %227 = vmatpush.msra.mxu0 %v200
    %228 = vmatpush.msra.mxu0 %v199
    %229 = vmatpush.msra.mxu0 %v198
    %230 = vmatmul.f32.gmra.mxu0 %v212
    %v231 = vpop.f32.mrf.mxu0
    %v232 = vadd.f32 %v208, %v231
    %233 = vdwg.mxu0
    %v234 = vmax.f32 %v232, 0.0
    %v235 = vld [vmem:[#allocation11] sm:$0xff]
    %v236 = vld [vmem:[#allocation11 + $0x8] sm:$0xff]
    %v237 = vld [vmem:[#allocation11 + $0x10] sm:$0xff]
    %v238 = vld [vmem:[#allocation11 + $0x18] sm:$0xff]
    %v239 = vld [vmem:[#allocation11 + $0x20] sm:$0xff]
    %v240 = vld [vmem:[#allocation11 + $0x28] sm:$0xff]
    %v241 = vld [vmem:[#allocation11 + $0x30] sm:$0xff]
    %v242 = vld [vmem:[#allocation11 + $0x38] sm:$0xff]
    %v243 = vld [vmem:[#allocation13] sm:$0x1]
    %v245 = vperm.slane %v243, 0
    %v248 = vsel %vm210, %v234, 0
    %250 = vmatpush.msra.mxu0 0.0
    %251 = vmatpush.msra.mxu0 0.0
    %252 = vmatpush.msra.mxu0 0.0
    %253 = vmatpush.msra.mxu0 0.0
    %254 = vmatpush.msra.mxu0 0.0
    %255 = vmatpush.msra.mxu0 0.0
    %256 = vmatpush.msra.mxu0 0.0
    %257 = vmatpush.msra.mxu0 0.0
    %258 = vmatpush.msra.mxu0 %v242
    %259 = vmatpush.msra.mxu0 %v241
    %260 = vmatpush.msra.mxu0 %v240
    %261 = vmatpush.msra.mxu0 %v239
    %262 = vmatpush.msra.mxu0 %v238
    %263 = vmatpush.msra.mxu0 %v237
    %264 = vmatpush.msra.mxu0 %v236
    %265 = vmatpush.msra.mxu0 %v235
    %266 = vmatmul.f32.gmra.mxu0 %v248
    %v267 = vpop.f32.mrf.mxu0
    %v268 = vadd.f32 %v245, %v267
    %269 = vdwg.mxu0
    %v270 = vmax.f32 %v268, 0.0
    %v271 = vld [vmem:[%s9] sm:$0xff]
    %v272 = vld [vmem:[%s9 + $0x8] sm:$0xff]
    %v273 = vld [vmem:[%s9 + $0x10] sm:$0xff]
    %v274 = vld [vmem:[%s9 + $0x18] sm:$0xff]
    %v275 = vld [vmem:[%s9 + $0x20] sm:$0xff]
    %v276 = vld [vmem:[%s9 + $0x28] sm:$0xff]
    %v277 = vld [vmem:[%s9 + $0x30] sm:$0xff]
    %v278 = vld [vmem:[%s9 + $0x38] sm:$0xff]
    %v279 = vld [vmem:[%s10] sm:$0x1]
    %v281 = vperm.slane %v279, 0
    %v284 = vsel %vm210, %v270, 0
    %286 = vmatpush.msra.mxu0 0.0
    %287 = vmatpush.msra.mxu0 0.0
    %288 = vmatpush.msra.mxu0 0.0
    %289 = vmatpush.msra.mxu0 0.0
    %290 = vmatpush.msra.mxu0 0.0
    %291 = vmatpush.msra.mxu0 0.0
    %292 = vmatpush.msra.mxu0 0.0
    %293 = vmatpush.msra.mxu0 0.0
    %294 = vmatpush.msra.mxu0 %v278
    %295 = vmatpush.msra.mxu0 %v277
    %296 = vmatpush.msra.mxu0 %v276
    %297 = vmatpush.msra.mxu0 %v275
    %298 = vmatpush.msra.mxu0 %v274
    %299 = vmatpush.msra.mxu0 %v273
    %300 = vmatpush.msra.mxu0 %v272
    %301 = vmatpush.msra.mxu0 %v271
    %302 = vmatmul.f32.gmra.mxu0 %v284
    %v303 = vpop.f32.mrf.mxu0
    %v304 = vadd.f32 %v281, %v303
    %305 = vdwg.mxu0
    %306 = vst.msk [vmem:[#allocation14] sm:$0xff] %vm144, %v304
    // Predicated region
    $region74: #{critic_forward.1} parent=1 // pred_check
      _
    $region75: #{critic_forward.1} parent=1 // pred_check_branch
      %308 = sbr.rel (0) target = $region77
    $region76: #{critic_forward.1} parent=1 // pred_region
      %310 = vsyncadd [#allocation4], 0
      %s312 = sshll.u32 [#allocation14], 4
      %s313 = int_to_ptr.vmem [resolvable:$true] %s312
      %s314 = sshll.u32 %s11, 4
      %s315 = int_to_ptr.hbm [resolvable:$true] %s314
      %317 = dma.vmem_to_hbm [thread:$0]  %s313, 128, %s315, [#allocation4]
    $region77: #{critic_forward.1} parent=1 // pred_fallthru
      _
    // Predicated region
    $region78: #{critic_forward.1} parent=1 // pred_check
      _
    $region79: #{critic_forward.1} parent=1 // pred_check_branch
      %319 = sbr.rel (0) target = $region81
    $region80: #{critic_forward.1} parent=1 // pred_region
      %321 = dma.done [#allocation4], 128
    $region81: #{critic_forward.1} parent=1 // pred_fallthru
      _
    %322 = vsyncpa [#allocation3], 1
    %323 = vsyncpa [#allocation6], 1
    %324 = vsyncpa [#allocation9], 1
    %325 = vsyncpa [#allocation12], 1
    %326 = vsyncpa [#allocation4], 1

</llo_original>
